<compile_context>
chip_gen: v7x
topology: tpu7x:2x2x1
jax: 0.10.0
libtpu: 0.0.40
codegen_flags: <defaults>
</compile_context>

<pallas_src>
import functools

import jax
import jax.numpy as jnp
from jax.experimental import pallas as pl
from jax.experimental.pallas import tpu as pltpu


def _round_up(x: int, m: int) -> int:
    return (x + m - 1) // m * m


def _vmem_budget_and_limit():
    """Generation-aware VMEM sizing: ~3/4 of physical for the tile budget."""
    try:
        cap = int(getattr(pltpu.get_tpu_info(), "vmem_capacity_bytes", 0) or 0)
    except Exception:
        cap = 0
    if cap <= 0:
        cap = 64 * 1024 * 1024                     # conservative (v7x-sized) fallback
    budget = cap * 3 // 4                          # 96 MiB on 128-MiB parts, 48 MiB on v7x
    limit = min(budget + 8 * 1024 * 1024, cap)
    return budget, limit


def _pick_b_tile(batch: int, k: int, n_pad: int, out_bytes: int,
                 vmem_budget_bytes: int) -> int:
    """Pick the batch tile: as large as the VMEM budget allows (cap 1024),
    but small enough that the grid has >=2 steps for small batches (v7x 2 TC)."""
    f32 = 4
    k_lanes = _round_up(k, 128)
    # fused weight, double-buffered worst case (constant index_map, but sized safely)
    fixed = 2 * _round_up(k, 8) * (2 * n_pad) * f32
    per_row = (2 * k_lanes * f32                        # x tile, double-buffered
               + 2 * 128 * f32                          # library tile (lane-padded)
               + 3 * 2 * n_pad * out_bytes              # 3 outputs, double-buffered
               + 4 * 2 * n_pad * f32)                   # fused matmul result + softmax temps
    avail = max(vmem_budget_bytes - fixed, 8 * per_row)
    bt = max(8, (avail // per_row) // 8 * 8)
    bt = min(bt, 1024)
    if batch > 8:
        # keep >=2 grid steps so both v7x TensorCores get work on small batches
        bt = min(bt, _round_up(pl.cdiv(batch, 2), 8))
    bt = min(bt, _round_up(batch, 8))
    return int(bt)


def prepare_linear_decoder_weights(w_scale_t, w_drop_t, compute_dtype=jnp.float32):
    """One-time (model-init) prep: fuse + lane-pad the two Linear heads and
    append the softmax pad-mask row.

    w_scale_t / w_drop_t: (K, n_output) = transposed PyTorch Linear weights,
    with K = n_input + sum(n_cat_list).  Returns (K + 1, 2 * n_pad).
    """
    K, n_output = w_scale_t.shape
    assert w_drop_t.shape == (K, n_output)
    n_pad = _round_up(n_output, 128)

    def pad_cols(w):
        return jnp.pad(w, ((0, 0), (0, n_pad - n_output)))

    w = jnp.concatenate([pad_cols(w_scale_t), pad_cols(w_drop_t)], axis=-1)  # (K, 2*n_pad)

    # Mask row: the forward appends a constant-1 column to x; this row adds
    # -1e30 to the padded scale-head logits so they vanish from the softmax
    # denominator.  Baked into the MXU pass -> no per-step iota/where in-kernel.
    lane = jnp.arange(2 * n_pad)
    mask_row = jnp.where((lane >= n_output) & (lane < n_pad), -1e30, 0.0)
    mask_row = mask_row[None, :].astype(w.dtype)

    w_fused = jnp.concatenate([w, mask_row], axis=0).astype(compute_dtype)   # (K+1, 2*n_pad)
    return w_fused


def _decoder_kernel(x_ref, w_ref, lib_ref,
                    scale_ref, rate_ref, drop_ref, *, n_valid, n_pad):
    # One fused MXU pass serves both heads (K is tiny, matmul fixed cost dominates).
    fused = jnp.dot(x_ref[...], w_ref[...], preferred_element_type=jnp.float32)
    raw = fused[:, :n_pad]            # factor_regressor logits (padded cols hold -1e30)
    drop = fused[:, n_pad:]           # px_dropout logits

    # Row-wise softmax; padded columns contribute exp(-1e30 - m) == 0.
    m = jnp.max(raw, axis=-1, keepdims=True)
    e = jnp.exp(raw - m)
    denom = jnp.sum(e, axis=-1, keepdims=True)
    # Exact reciprocal of the (Bt, 1) denominator; negligible cost at this shape.
    inv = pl.reciprocal(denom, approx=False)

    scale = e * inv
    # Fold exp(library) into the per-row normalizer: one (Bt,1) factor, one
    # broadcast multiply, instead of re-scaling the already-normalized px_scale.
    rate = e * (jnp.exp(lib_ref[...]) * inv)

    # Stores are n_valid (= n_output) wide: outputs leave the kernel at their
    # final shape, no post-kernel column slice / extra HBM pass.
    scale_ref[...] = scale[:, :n_valid].astype(scale_ref.dtype)
    rate_ref[...] = rate[:, :n_valid].astype(rate_ref.dtype)
    drop_ref[...] = drop[:, :n_valid].astype(drop_ref.dtype)


@functools.partial(
    jax.jit, static_argnames=("n_output", "n_cat", "out_dtype"),
)
def linear_decoder_scvi(z, library, cat, w_fused, *,
                        n_output, n_cat, out_dtype=jnp.float32):
    """Forward pass of LinearDecoderSCVI.

    z: (B, n_input), library: (B, 1), cat: (B, 1) int32, and w_fused from
    prepare_linear_decoder_weights() (built once at model init).
    Returns (px_scale, px_r=None, px_rate, px_dropout), each (B, n_output).
    """
    B, n_input = z.shape
    K1 = n_input + n_cat + 1                       # +1: ones column carrying the mask row
    assert w_fused.shape[0] == K1, "w_fused rows must be n_input + n_cat + 1"
    n_pad = w_fused.shape[1] // 2
    assert n_pad == _round_up(n_output, 128)

    # Covariate injection (FCLayers layer 0 glue) + the constant-1 mask column.
    compute_dtype = w_fused.dtype
    parts = [z.astype(compute_dtype)]
    if n_cat > 0:
        parts.append(jax.nn.one_hot(cat[:, 0], n_cat, dtype=compute_dtype))
    parts.append(jnp.ones((B, 1), dtype=compute_dtype))
    x = jnp.concatenate(parts, axis=-1)            # (B, K1)
    library = library.astype(jnp.float32)

    out_bytes = jnp.dtype(out_dtype).itemsize
    vmem_budget, vmem_limit = _vmem_budget_and_limit()
    b_tile = _pick_b_tile(B, K1, n_pad, out_bytes, vmem_budget)
    grid = (pl.cdiv(B, b_tile),)                   # ragged last block masked on write

    out_shapes = tuple(jax.ShapeDtypeStruct((B, n_output), out_dtype)
                       for _ in range(3))
    kernel = functools.partial(_decoder_kernel, n_valid=n_output, n_pad=n_pad)

    px_scale, px_rate, px_dropout = pl.pallas_call(
        kernel,
        out_shape=out_shapes,
        grid=grid,
        in_specs=[
            pl.BlockSpec((b_tile, K1), lambda i: (i, 0)),        # x: tiled on batch
            pl.BlockSpec((K1, 2 * n_pad), lambda i: (0, 0)),     # fused W: VMEM-resident
            pl.BlockSpec((b_tile, 1), lambda i: (i, 0)),         # library
        ],
        out_specs=tuple(
            pl.BlockSpec((b_tile, n_output), lambda i: (i, 0)) for _ in range(3)
        ),
        compiler_params=pltpu.CompilerParams(
            dimension_semantics=("parallel",),                   # megacore / 2-TC on v7x
            vmem_limit_bytes=int(vmem_limit),
        ),
    )(x, w_fused, library)

    px_r = None  # matches the module: px_r is always None in forward
    return px_scale, px_r, px_rate, px_dropout


if __name__ == "__main__":
    # Small, module-consistent shapes. n_output deliberately NOT a multiple of
    # 128 and B not a multiple of the tile, to exercise ragged blocks + mask row.
    B = 12          # batch
    n_input = 32    # latent dim (z)
    n_output = 200  # genes
    n_cat = 4       # single categorical covariate with 4 categories

    key = jax.random.PRNGKey(0)
    k1, k2, k3, k4, k5 = jax.random.split(key, 5)

    z = jax.random.normal(k1, (B, n_input), dtype=jnp.float32)
    library = jax.random.normal(k2, (B, 1), dtype=jnp.float32) * 0.1
    cat = jax.random.randint(k3, (B, 1), 0, n_cat, dtype=jnp.int32)

    K = n_input + n_cat
    # PyTorch Linear weight is (n_out, n_in); we store the transpose (n_in, n_out).
    w_scale_t = jax.random.normal(k4, (K, n_output), dtype=jnp.float32) * 0.05
    w_drop_t = jax.random.normal(k5, (K, n_output), dtype=jnp.float32) * 0.05

    # One-time weight prep (model init) -- not part of the per-call forward.
    w_fused = prepare_linear_decoder_weights(w_scale_t, w_drop_t,
                                             compute_dtype=jnp.float32)
    w_fused = jax.block_until_ready(w_fused)

    px_scale, px_r, px_rate, px_dropout = linear_decoder_scvi(
        z, library, cat, w_fused, n_output=n_output, n_cat=n_cat
    )
    jax.block_until_ready((px_scale, px_rate, px_dropout))

    # Pure-JAX reference check.
    one_hot_cat = jax.nn.one_hot(cat[:, 0], n_cat, dtype=z.dtype)
    x_ref = jnp.concatenate([z, one_hot_cat], axis=-1)
    raw_ref = x_ref @ w_scale_t
    px_scale_ref = jax.nn.softmax(raw_ref, axis=-1)
    px_rate_ref = jnp.exp(library) * px_scale_ref
    px_dropout_ref = x_ref @ w_drop_t

    assert px_r is None
    assert px_scale.shape == (B, n_output)
    assert px_rate.shape == (B, n_output)
    assert px_dropout.shape == (B, n_output)
    assert jnp.allclose(px_scale, px_scale_ref, atol=1e-5, rtol=1e-5)
    assert jnp.allclose(px_rate, px_rate_ref, atol=1e-5, rtol=1e-5)
    assert jnp.allclose(px_dropout, px_dropout_ref, atol=1e-5, rtol=1e-5)

    print("KERNEL_OK")
</pallas_src>

<mosaic_0001>
module attributes {stable_mosaic.version = 11 : i64} {
  func.func @_decoder_kernel(%arg0: i32, %arg1: memref<8x37xf32, #tpu.memory_space<vmem>>, %arg2: memref<37x512xf32, #tpu.memory_space<vmem>>, %arg3: memref<8x1xf32, #tpu.memory_space<vmem>>, %arg4: memref<8x200xf32, #tpu.memory_space<vmem>>, %arg5: memref<8x200xf32, #tpu.memory_space<vmem>>, %arg6: memref<8x200xf32, #tpu.memory_space<vmem>>) attributes {dimension_semantics = [#tpu.dimension_semantics<parallel>], iteration_bounds = array<i64: 2>, scalar_prefetch = 0 : i64, scratch_operands = 0 : i64, tpu.core_type = #tpu.core_type<tc>, window_params = [{transform_indices = @transform_0, window_bounds = array<i64: 8, 37>}, {pipeline_mode = #tpu.pipeline_mode<synchronous>, transform_indices = @transform_1, window_bounds = array<i64: 37, 512>}, {transform_indices = @transform_2, window_bounds = array<i64: 8, 1>}, {transform_indices = @transform_3, window_bounds = array<i64: 8, 200>}, {transform_indices = @transform_4, window_bounds = array<i64: 8, 200>}, {transform_indices = @transform_5, window_bounds = array<i64: 8, 200>}]} {
    %c0 = arith.constant 0 : index
    %c0_0 = arith.constant 0 : index
    %0 = vector.load %arg1[%c0, %c0_0] : memref<8x37xf32, #tpu.memory_space<vmem>>, vector<8x37xf32>
    %c0_1 = arith.constant 0 : index
    %c0_2 = arith.constant 0 : index
    %1 = vector.load %arg2[%c0_1, %c0_2] : memref<37x512xf32, #tpu.memory_space<vmem>>, vector<37x512xf32>
    %cst = arith.constant dense<0.000000e+00> : vector<8x512xf32>
    %2 = tpu.matmul %0, %1, %cst {dimension_numbers = #tpu.dot_dimension_numbers<[1], [0], [0], [1], [0, 0, 1, 1], [], []>} : vector<8x37xf32>, vector<37x512xf32>, vector<8x512xf32> -> vector<8x512xf32>
    %3 = vector.extract_strided_slice %2 {offsets = [0, 0], sizes = [8, 256], strides = [1, 1]} : vector<8x512xf32> to vector<8x256xf32>
    %4 = vector.extract_strided_slice %2 {offsets = [0, 256], sizes = [8, 256], strides = [1, 1]} : vector<8x512xf32> to vector<8x256xf32>
    %cst_3 = arith.constant dense<0xFF800000> : vector<8xf32>
    %5 = vector.multi_reduction <maximumf>, %3, %cst_3 [1] : vector<8x256xf32> to vector<8xf32>
    %6 = vector.shape_cast %5 : vector<8xf32> to vector<8x1xf32>
    %7 = vector.broadcast %6 : vector<8x1xf32> to vector<8x256xf32>
    %8 = arith.subf %3, %7 : vector<8x256xf32>
    %9 = math.exp %8 : vector<8x256xf32>
    %cst_4 = arith.constant dense<0.000000e+00> : vector<8xf32>
    %10 = vector.multi_reduction <add>, %9, %cst_4 [1] : vector<8x256xf32> to vector<8xf32>
    %11 = vector.shape_cast %10 : vector<8xf32> to vector<8x1xf32>
    %12 = tpu.reciprocal %11 : vector<8x1xf32> -> vector<8x1xf32>
    %13 = vector.broadcast %12 : vector<8x1xf32> to vector<8x256xf32>
    %14 = arith.mulf %9, %13 : vector<8x256xf32>
    %c0_5 = arith.constant 0 : index
    %c0_6 = arith.constant 0 : index
    %15 = vector.load %arg3[%c0_5, %c0_6] : memref<8x1xf32, #tpu.memory_space<vmem>>, vector<8x1xf32>
    %16 = math.exp %15 : vector<8x1xf32>
    %17 = arith.mulf %16, %12 : vector<8x1xf32>
    %18 = vector.broadcast %17 : vector<8x1xf32> to vector<8x256xf32>
    %19 = arith.mulf %9, %18 : vector<8x256xf32>
    %20 = vector.extract_strided_slice %14 {offsets = [0, 0], sizes = [8, 200], strides = [1, 1]} : vector<8x256xf32> to vector<8x200xf32>
    %c0_7 = arith.constant 0 : index
    %c0_8 = arith.constant 0 : index
    %21 = vector.load %arg4[%c0_7, %c0_8] : memref<8x200xf32, #tpu.memory_space<vmem>>, vector<8x200xf32>
    tpu.vector_store %arg4[%c0_7, %c0_8], %20 {strides = array<i32>} : memref<8x200xf32, #tpu.memory_space<vmem>>, vector<8x200xf32>,
    %22 = vector.extract_strided_slice %19 {offsets = [0, 0], sizes = [8, 200], strides = [1, 1]} : vector<8x256xf32> to vector<8x200xf32>
    %c0_9 = arith.constant 0 : index
    %c0_10 = arith.constant 0 : index
    %23 = vector.load %arg5[%c0_9, %c0_10] : memref<8x200xf32, #tpu.memory_space<vmem>>, vector<8x200xf32>
    tpu.vector_store %arg5[%c0_9, %c0_10], %22 {strides = array<i32>} : memref<8x200xf32, #tpu.memory_space<vmem>>, vector<8x200xf32>,
    %24 = vector.extract_strided_slice %4 {offsets = [0, 0], sizes = [8, 200], strides = [1, 1]} : vector<8x256xf32> to vector<8x200xf32>
    %c0_11 = arith.constant 0 : index
    %c0_12 = arith.constant 0 : index
    %25 = vector.load %arg6[%c0_11, %c0_12] : memref<8x200xf32, #tpu.memory_space<vmem>>, vector<8x200xf32>
    tpu.vector_store %arg6[%c0_11, %c0_12], %24 {strides = array<i32>} : memref<8x200xf32, #tpu.memory_space<vmem>>, vector<8x200xf32>,
    return
  }
  func.func @transform_0(%arg0: i32) -> (i32, i32) {
    %c0_i32 = arith.constant 0 : i32
    %c0_i32_0 = arith.constant 0 : i32
    return %arg0, %c0_i32 : i32, i32
  }
  func.func @transform_1(%arg0: i32) -> (i32, i32) {
    %c0_i32 = arith.constant 0 : i32
    %c0_i32_0 = arith.constant 0 : i32
    %c0_i32_1 = arith.constant 0 : i32
    return %c0_i32, %c0_i32_0 : i32, i32
  }
  func.func @transform_2(%arg0: i32) -> (i32, i32) {
    %c0_i32 = arith.constant 0 : i32
    %c0_i32_0 = arith.constant 0 : i32
    return %arg0, %c0_i32 : i32, i32
  }
  func.func @transform_3(%arg0: i32) -> (i32, i32) {
    %c0_i32 = arith.constant 0 : i32
    %c0_i32_0 = arith.constant 0 : i32
    return %arg0, %c0_i32 : i32, i32
  }
  func.func @transform_4(%arg0: i32) -> (i32, i32) {
    %c0_i32 = arith.constant 0 : i32
    %c0_i32_0 = arith.constant 0 : i32
    return %arg0, %c0_i32 : i32, i32
  }
  func.func @transform_5(%arg0: i32) -> (i32, i32) {
    %c0_i32 = arith.constant 0 : i32
    %c0_i32_0 = arith.constant 0 : i32
    return %arg0, %c0_i32 : i32, i32
  }
}

</mosaic_0001>

<llo_original>
// kernel: linear_decoder_scvi.1
$region0: #{linear_decoder_scvi.1}
  #allocation0 [shape = 'u32[]', space=smem, size = 0x4, offset = 0x4, fixed_abs, tag = 'smem constant byte address 0x4 - core index']
  #allocation1 [shape = 'u32[144,128]{1,0:T(1,128)}', space=vmem, size = 0x12000, scoped, tag = 'internal scratch']
  %s0 = inlined_call_operand.vmem [shape: f32[12,37], index: 0, kind: input, shape index: {}]
  %s1 = inlined_call_operand.hbm [shape: f32[37,512], index: 1, kind: input, shape index: {}]
  %s2 = inlined_call_operand.vmem [shape: f32[12,1], index: 2, kind: input, shape index: {}]
  %s3 = inlined_call_operand.hbm [shape: f32[12,200], index: 3, kind: output, shape index: {0}]
  %s4 = inlined_call_operand.hbm [shape: f32[12,200], index: 4, kind: output, shape index: {1}]
  %s5 = inlined_call_operand.hbm [shape: f32[12,200], index: 5, kind: output, shape index: {2}]
  %6 = xla_tuple %s3, %s4, %s5
  %s7 = sld [smem:[#allocation0]]
  $region65: #{linear_decoder_scvi.1} parent=0
    _
  %s9 = ssub.s32 1, %s7
  %s10 = scalar_select 0, %s9, %s7
  $region1: #{linear_decoder_scvi.1} parent=0
    #allocation2 [shape = 'u8[81920]{0}', space=vmem, size = 0x14000, scoped, tag = 'input window, operand 1, single buffered']
    #allocation3 [shape = 's32[2]{0}', space=sflag, size = 0x8, scoped, tag = 'scoped memory for linear_decoder_scvi.1']
    #allocation4 [shape = 's32[2]{0}', space=sflag, size = 0x8, scoped, tag = 'scoped memory for linear_decoder_scvi.1']
    #allocation5 [shape = 'u8[16384]{0}', space=vmem, size = 0x4000, scoped, tag = 'output window, operand 0']
    #allocation6 [shape = 'u8[16384]{0}', space=vmem, size = 0x4000, scoped, tag = 'output window, operand 1']
    #allocation7 [shape = 's32[2]{0}', space=sflag, size = 0x8, scoped, tag = 'scoped memory for linear_decoder_scvi.1']
    #allocation8 [shape = 'u8[16384]{0}', space=vmem, size = 0x4000, scoped, tag = 'output window, operand 2']
    %11 = vsyncpa [#allocation3], 0
    %12 = vsyncpa [#allocation4], 0
    %s13 = scalar_lea.sflag [#allocation4], 1
    %14 = vsyncpa %s13, 0
    %15 = vsyncpa [#allocation7], 0
    %s16 = scalar_lea.sflag [#allocation7], 1
    %17 = vsyncpa %s16, 0
    loop: start=0, step=1, limit=4
    $region2: #{linear_decoder_scvi.1} parent=1 // loop_pre_header
      _
    $region3: #{linear_decoder_scvi.1} parent=1 // loop_header
      %s19 = sphi 0, %s23
      %p20 = scmp.ge.s32.totalorder %s19, 4
      %s29 = sphi 0, %s31
      %s32 = sphi 0, %s29
      %s33 = sphi 0, %s32
      %s49 = sphi 0, %s33
      %s53 = sphi 0, %s53
      %s55 = sphi 0, %s53
      %s56 = sphi 0, %s55
      %s70 = sphi 0, %s56
      %s76 = sphi 0, %s78
      %s79 = sphi 0, %s76
      %s80 = sphi 0, %s79
      %s96 = sphi 0, %s80
      %s102 = sphi 0, %s104
      %s105 = sphi 0, %s102
      %s106 = sphi 0, %s105
      %s122 = sphi 0, %s106
      %s128 = sphi 0, %s130
      %s131 = sphi 0, %s128
      %s132 = sphi 0, %s131
      %s148 = sphi 0, %s132
      %s154 = sphi 0, %s156
      %s157 = sphi 0, %s154
      %s158 = sphi 0, %s157
      %s174 = sphi 0, %s158
    $region4: #{linear_decoder_scvi.1} parent=1 // loop_header_branch
      %22 = sbr.rel (%p20) target = $region8
    $region5: #{linear_decoder_scvi.1} parent=1 // loop_body
      %s24 = ssub.s32 %s19, 1
      %s25 = ssub.s32 %s19, 2
      %s26 = sadd.s32 %s19, 1
      %s27 = ssub.s32 %s19, %s26
      %p28 = scmp.eq.s32.totalorder %s27, 0
      %s30 = sadd.s32 %s29, 1
      %s31 = scalar_select %p28, %s29, %s30
      %p34 = pneg %p28
      %p35 = scmp.eq.s32.totalorder %s19, 1
      %p36 = por %p34, %p35
      %p37 = scmp.ne.s32.totalorder %s29, %s32
      %p38 = scmp.eq.s32.totalorder %s19, 0
      %p39 = por %p37, %p38
      %p40 = scmp.ne.s32.totalorder %s29, %s32
      %p41 = scmp.eq.s32.totalorder %s24, 1
      %p42 = por %p40, %p41
      %p43 = scmp.ne.s32.totalorder %s32, %s33
      %p44 = scmp.eq.s32.totalorder %s24, 0
      %p45 = por %p43, %p44
      %p46 = scmp.ne.s32.totalorder %s32, %s33
      %p47 = scmp.eq.s32.totalorder %s25, 1
      %p48 = por %p46, %p47
      %p50 = scmp.ne.s32.totalorder %s33, %s49
      %p51 = scmp.eq.s32.totalorder %s25, 0
      %p52 = por %p50, %p51
      %s54 = sadd.s32 %s53, 1
      %p57 = scmp.eq.s32.totalorder %s19, 1
      %p58 = scmp.ne.s32.totalorder %s53, %s55
      %p59 = scmp.eq.s32.totalorder %s19, 0
      %p60 = por %p58, %p59
      %p61 = scmp.ne.s32.totalorder %s53, %s55
      %p62 = scmp.eq.s32.totalorder %s24, 1
      %p63 = por %p61, %p62
      %p64 = scmp.ne.s32.totalorder %s55, %s56
      %p65 = scmp.eq.s32.totalorder %s24, 0
      %p66 = por %p64, %p65
      %p67 = scmp.ne.s32.totalorder %s55, %s56
      %p68 = scmp.eq.s32.totalorder %s25, 1
      %p69 = por %p67, %p68
      %p71 = scmp.ne.s32.totalorder %s56, %s70
      %p72 = scmp.eq.s32.totalorder %s25, 0
      %p73 = por %p71, %p72
      %s74 = ssub.s32 %s19, %s26
      %p75 = scmp.eq.s32.totalorder %s74, 0
      %s77 = sadd.s32 %s76, 1
      %s78 = scalar_select %p75, %s76, %s77
      %p81 = pneg %p75
      %p82 = scmp.eq.s32.totalorder %s19, 1
      %p83 = por %p81, %p82
      %p84 = scmp.ne.s32.totalorder %s76, %s79
      %p85 = scmp.eq.s32.totalorder %s19, 0
      %p86 = por %p84, %p85
      %p87 = scmp.ne.s32.totalorder %s76, %s79
      %p88 = scmp.eq.s32.totalorder %s24, 1
      %p89 = por %p87, %p88
      %p90 = scmp.ne.s32.totalorder %s79, %s80
      %p91 = scmp.eq.s32.totalorder %s24, 0
      %p92 = por %p90, %p91
      %p93 = scmp.ne.s32.totalorder %s79, %s80
      %p94 = scmp.eq.s32.totalorder %s25, 1
      %p95 = por %p93, %p94
      %p97 = scmp.ne.s32.totalorder %s80, %s96
      %p98 = scmp.eq.s32.totalorder %s25, 0
      %p99 = por %p97, %p98
      %s100 = ssub.s32 %s19, %s26
      %p101 = scmp.eq.s32.totalorder %s100, 0
      %s103 = sadd.s32 %s102, 1
      %s104 = scalar_select %p101, %s102, %s103
      %p107 = pneg %p101
      %p108 = scmp.eq.s32.totalorder %s19, 1
      %p109 = por %p107, %p108
      %p110 = scmp.ne.s32.totalorder %s102, %s105
      %p111 = scmp.eq.s32.totalorder %s19, 0
      %p112 = por %p110, %p111
      %p113 = scmp.ne.s32.totalorder %s102, %s105
      %p114 = scmp.eq.s32.totalorder %s24, 1
      %p115 = por %p113, %p114
      %p116 = scmp.ne.s32.totalorder %s105, %s106
      %p117 = scmp.eq.s32.totalorder %s24, 0
      %p118 = por %p116, %p117
      %p119 = scmp.ne.s32.totalorder %s105, %s106
      %p120 = scmp.eq.s32.totalorder %s25, 1
      %p121 = por %p119, %p120
      %p123 = scmp.ne.s32.totalorder %s106, %s122
      %p124 = scmp.eq.s32.totalorder %s25, 0
      %p125 = por %p123, %p124
      %s126 = ssub.s32 %s19, %s26
      %p127 = scmp.eq.s32.totalorder %s126, 0
      %s129 = sadd.s32 %s128, 1
      %s130 = scalar_select %p127, %s128, %s129
      %p133 = pneg %p127
      %p134 = scmp.eq.s32.totalorder %s19, 1
      %p135 = por %p133, %p134
      %p136 = scmp.ne.s32.totalorder %s128, %s131
      %p137 = scmp.eq.s32.totalorder %s19, 0
      %p138 = por %p136, %p137
      %p139 = scmp.ne.s32.totalorder %s128, %s131
      %p140 = scmp.eq.s32.totalorder %s24, 1
      %p141 = por %p139, %p140
      %p142 = scmp.ne.s32.totalorder %s131, %s132
      %p143 = scmp.eq.s32.totalorder %s24, 0
      %p144 = por %p142, %p143
      %p145 = scmp.ne.s32.totalorder %s131, %s132
      %p146 = scmp.eq.s32.totalorder %s25, 1
      %p147 = por %p145, %p146
      %p149 = scmp.ne.s32.totalorder %s132, %s148
      %p150 = scmp.eq.s32.totalorder %s25, 0
      %p151 = por %p149, %p150
      %s152 = ssub.s32 %s19, %s26
      %p153 = scmp.eq.s32.totalorder %s152, 0
      %s155 = sadd.s32 %s154, 1
      %s156 = scalar_select %p153, %s154, %s155
      %p159 = pneg %p153
      %p160 = scmp.eq.s32.totalorder %s19, 1
      %p161 = por %p159, %p160
      %p162 = scmp.ne.s32.totalorder %s154, %s157
      %p163 = scmp.eq.s32.totalorder %s19, 0
      %p164 = por %p162, %p163
      %p165 = scmp.ne.s32.totalorder %s154, %s157
      %p166 = scmp.eq.s32.totalorder %s24, 1
      %p167 = por %p165, %p166
      %p168 = scmp.ne.s32.totalorder %s157, %s158
      %p169 = scmp.eq.s32.totalorder %s24, 0
      %p170 = por %p168, %p169
      %p171 = scmp.ne.s32.totalorder %s157, %s158
      %p172 = scmp.eq.s32.totalorder %s25, 1
      %p173 = por %p171, %p172
      %p175 = scmp.ne.s32.totalorder %s158, %s174
      %p176 = scmp.eq.s32.totalorder %s25, 0
      %p177 = por %p175, %p176
      %p178 = scmp.le.s32.totalorder 1, %s19
      %p179 = scmp.lt.s32.totalorder %s19, 3
      %p180 = pnand %p178, %p179
      %p181 = pneg %p180
      // Predicated region
      $region9: #{linear_decoder_scvi.1} parent=5 // pred_check
        _
      $region10: #{linear_decoder_scvi.1} parent=5 // pred_check_branch
        %183 = sbr.rel (%p180) target = $region12
      $region11: #{linear_decoder_scvi.1} parent=5 // pred_region
        %s184 = ssub.s32 %s19, 1
        // Predicated region
        $region13: #{linear_decoder_scvi.1} parent=11 // pred_check
          %p185 = pneg %p66
        $region14: #{linear_decoder_scvi.1} parent=11 // pred_check_branch
          %187 = sbr.rel (%p185) target = $region16
        $region15: #{linear_decoder_scvi.1} parent=11 // pred_region
          %s189 = ssub.s32 2560, 2560
          %190 = vsyncadd [#allocation3], %s189
          %s191 = sshll.u32 [#allocation2], 4
          %s192 = int_to_ptr.vmem [resolvable:$true] %s191
          %197 = dma.hbm_to_vmem [thread:$0]  %s1, 2560, %s192, [#allocation3], 512, 512, 32
        $region16: #{linear_decoder_scvi.1} parent=11 // pred_fallthru
          _
      $region12: #{linear_decoder_scvi.1} parent=5 // pred_fallthru
        _
      %p198 = scmp.lt.s32.totalorder %s19, 2
      // Predicated region
      $region17: #{linear_decoder_scvi.1} parent=5 // pred_check
        %p199 = pneg %p198
      $region18: #{linear_decoder_scvi.1} parent=5 // pred_check_branch
        %201 = sbr.rel (%p199) target = $region20
      $region19: #{linear_decoder_scvi.1} parent=5 // pred_region
        // Predicated region
        $region21: #{linear_decoder_scvi.1} parent=19 // pred_check
          %p202 = pneg %p39
        $region22: #{linear_decoder_scvi.1} parent=19 // pred_check_branch
          %204 = sbr.rel (%p202) target = $region24
        $region23: #{linear_decoder_scvi.1} parent=19 // pred_region
          %p205 = scmp.lt.s32.totalorder %s19, 1
          %s206 = scalar_select %p205, %s19, 1
          %s207 = smul.addr %s206, 8
          %s208 = scalar_lea.vmem %s0, %s207
        $region24: #{linear_decoder_scvi.1} parent=19 // pred_fallthru
          _
        // Predicated region
        $region25: #{linear_decoder_scvi.1} parent=19 // pred_check
          %p209 = pneg %p86
        $region26: #{linear_decoder_scvi.1} parent=19 // pred_check_branch
          %211 = sbr.rel (%p209) target = $region28
        $region27: #{linear_decoder_scvi.1} parent=19 // pred_region
          %p212 = scmp.lt.s32.totalorder %s19, 1
          %s213 = scalar_select %p212, %s19, 1
          %s214 = smul.addr %s213, 8
          %s215 = scalar_lea.vmem %s2, %s214
        $region28: #{linear_decoder_scvi.1} parent=19 // pred_fallthru
          _
      $region20: #{linear_decoder_scvi.1} parent=5 // pred_fallthru
        _
      %p216 = scmp.le.s32.totalorder 1, %s19
      %p217 = scmp.lt.s32.totalorder %s19, 3
      %p218 = pnand %p216, %p217
      %p219 = pneg %p218
      // Predicated region
      $region29: #{linear_decoder_scvi.1} parent=5 // pred_check
        _
      $region30: #{linear_decoder_scvi.1} parent=5 // pred_check_branch
        %221 = sbr.rel (%p218) target = $region32
      $region31: #{linear_decoder_scvi.1} parent=5 // pred_region
        %s222 = ssub.s32 %s19, 1
        // Predicated region
        $region33: #{linear_decoder_scvi.1} parent=31 // pred_check
          %p223 = pneg %p66
        $region34: #{linear_decoder_scvi.1} parent=31 // pred_check_branch
          %225 = sbr.rel (%p223) target = $region36
        $region35: #{linear_decoder_scvi.1} parent=31 // pred_region
          %226 = dma.done [#allocation3], 2560
        $region36: #{linear_decoder_scvi.1} parent=31 // pred_fallthru
          _
        %p227 = scmp.lt.s32.totalorder %s24, 1
        %s228 = scalar_select %p227, %s24, 1
        %s229 = smul.addr %s228, 8
        %s230 = scalar_lea.vmem %s0, %s229
        %p231 = pneg %p45
        %p232 = pneg %p42
        %p233 = pneg %p66
        %p234 = pneg %p63
        %p235 = scmp.lt.s32.totalorder %s24, 1
        %s236 = scalar_select %p235, %s24, 1
        %s237 = smul.addr %s236, 8
        %s238 = scalar_lea.vmem %s2, %s237
        %p239 = pneg %p92
        %p240 = pneg %p89
        %p241 = pneg %p118
        %p242 = pneg %p115
        %s243 = sand.u32 %s105, 1
        %s244 = scalar_lea.sflag [#allocation4], %s243
        %s245 = sand.u32 %s105, 1
        %s246 = smul.addr %s245, 16
        %s247 = scalar_lea.vmem [#allocation5], %s246
        %p248 = pneg %p144
        %p249 = pneg %p141
        %s250 = sand.u32 %s24, 1
        %s251 = scalar_lea.sflag [#allocation7], %s250
        %s252 = sand.u32 %s131, 1
        %s253 = smul.addr %s252, 16
        %s254 = scalar_lea.vmem [#allocation6], %s253
        %p255 = pneg %p170
        %p256 = pneg %p167
        %s257 = sand.u32 %s24, 1
        %s258 = scalar_lea.sflag [#allocation7], %s257
        %s259 = sand.u32 %s157, 1
        %s260 = smul.addr %s259, 16
        %s261 = scalar_lea.vmem [#allocation8], %s260
        %p262 = scmp.lt.s32.totalorder %s24, 1
        %s263 = scalar_select %p262, %s24, 1
        %s264 = smul.addr %s263, 8
        %s265 = scalar_lea.vmem %s0, %s264
        %p266 = scmp.lt.s32.totalorder %s24, 1
        %s267 = scalar_select %p266, %s24, 1
        %s268 = smul.addr %s267, 8
        %s269 = scalar_lea.vmem %s2, %s268
        %v270 = vld [vmem:[%s265] sm:$0xff]
        %v271 = vld [vmem:[#allocation2] sm:$0xff]
        %v272 = vld [vmem:[#allocation2 + $0x8] sm:$0xff]
        %v273 = vld [vmem:[#allocation2 + $0x10] sm:$0xff]
        %v274 = vld [vmem:[#allocation2 + $0x18] sm:$0xff]
        %v275 = vld [vmem:[#allocation2 + $0x20] sm:$0xff]
        %v276 = vld [vmem:[#allocation2 + $0x28] sm:$0xff]
        %v277 = vld [vmem:[#allocation2 + $0x30] sm:$0xff]
        %v278 = vld [vmem:[#allocation2 + $0x38] sm:$0xff]
        %v279 = vld [vmem:[#allocation2 + $0x40] sm:$0xff]
        %v280 = vld [vmem:[#allocation2 + $0x48] sm:$0xff]
        %v281 = vld [vmem:[#allocation2 + $0x50] sm:$0xff]
        %v282 = vld [vmem:[#allocation2 + $0x58] sm:$0xff]
        %v283 = vld [vmem:[#allocation2 + $0x60] sm:$0xff]
        %v284 = vld [vmem:[#allocation2 + $0x68] sm:$0xff]
        %v285 = vld [vmem:[#allocation2 + $0x70] sm:$0xff]
        %v286 = vld [vmem:[#allocation2 + $0x78] sm:$0xff]
        %v287 = vld [vmem:[#allocation2 + $0x80] sm:$0x1f]
        %v288 = vld [vmem:[#allocation2 + $0x88] sm:$0x1f]
        %v289 = vld [vmem:[#allocation2 + $0x90] sm:$0x1f]
        %v290 = vld [vmem:[#allocation2 + $0x98] sm:$0x1f]
        %vm291 = vcmask 302080
        %v293 = vsel %vm291, %v270, 0
        %vm295 = vcmask 1044480
        %v297 = vsel %vm295, %v287, 0
        %v300 = vsel %vm295, %v288, 0
        %v303 = vsel %vm295, %v289, 0
        %v306 = vsel %vm295, %v290, 0
        %308 = vmatprep.subr.mxu0 %v272
        %309 = vmatpush1.msra.mxu0 %v271
        %310 = vmatprep.subr.mxu0 %v276
        %311 = vmatpush1.msra.mxu0 %v275
        %312 = vmatprep.subr.mxu0 %v280
        %313 = vmatpush1.msra.mxu0 %v279
        %314 = vmatprep.subr.mxu0 %v284
        %315 = vmatpush1.msra.mxu0 %v283
        %316 = vmatprep.subr.mxu0 %v300
        %317 = vmatpush1.msra.mxu0 %v297
        %318 = vmatprep.subr.mxu0 0.0
        %319 = vmatpush1.msra.mxu0 0.0
        %320 = vmatprep.subr.mxu0 0.0
        %321 = vmatpush1.msra.mxu0 0.0
        %322 = vmatprep.subr.mxu0 0.0
        %323 = vmatpush1.msra.mxu0 0.0
        %324 = vmatprep.subr.mxu0 0.0
        %325 = vmatpush1.msra.mxu0 0.0
        %326 = vmatprep.subr.mxu0 0.0
        %327 = vmatpush1.msra.mxu0 0.0
        %328 = vmatprep.subr.mxu0 0.0
        %329 = vmatpush1.msra.mxu0 0.0
        %330 = vmatprep.subr.mxu0 0.0
        %331 = vmatpush1.msra.mxu0 0.0
        %332 = vmatprep.subr.mxu0 0.0
        %333 = vmatpush1.msra.mxu0 0.0
        %334 = vmatprep.subr.mxu0 0.0
        %335 = vmatpush1.msra.mxu0 0.0
        %336 = vmatprep.subr.mxu0 0.0
        %337 = vmatpush1.msra.mxu0 0.0
        %338 = vmatprep.subr.mxu0 0.0
        %339 = vmatpush1.msra.mxu0 0.0
        %340 = vmatprep.subr.mxu0 0.0
        %341 = vmatpush1.msra.mxu0 0.0
        %342 = vmatprep.subr.mxu0 0.0
        %343 = vmatpush1.msra.mxu0 0.0
        %344 = vmatprep.subr.mxu0 0.0
        %345 = vmatpush1.msra.mxu0 0.0
        %346 = vmatprep.subr.mxu0 0.0
        %347 = vmatpush1.msra.mxu0 0.0
        %348 = vmatprep.subr.mxu0 0.0
        %349 = vmatpush1.msra.mxu0 0.0
        %350 = vmatprep.subr.mxu0 0.0
        %351 = vmatpush1.msra.mxu0 0.0
        %352 = vmatprep.subr.mxu0 0.0
        %353 = vmatpush1.msra.mxu0 0.0
        %354 = vmatprep.subr.mxu0 0.0
        %355 = vmatpush1.msra.mxu0 0.0
        %356 = vmatprep.subr.mxu0 0.0
        %357 = vmatpush1.msra.mxu0 0.0
        %358 = vmatprep.subr.mxu0 0.0
        %359 = vmatpush1.msra.mxu0 0.0
        %360 = vmatprep.subr.mxu0 0.0
        %361 = vmatpush1.msra.mxu0 0.0
        %362 = vmatprep.subr.mxu0 0.0
        %363 = vmatpush1.msra.mxu0 0.0
        %364 = vmatprep.subr.mxu0 0.0
        %365 = vmatpush1.msra.mxu0 0.0
        %366 = vmatprep.subr.mxu0 0.0
        %367 = vmatpush1.msra.mxu0 0.0
        %368 = vmatprep.subr.mxu0 0.0
        %369 = vmatpush1.msra.mxu0 0.0
        %370 = vmatprep.subr.mxu0 0.0
        %371 = vmatpush1.msra.mxu0 0.0
        %372 = vmatprep.mubr.f32.mxu0 0.0
        %373 = vmatmul.mubr.f32.gmra.mrb[0].mxu0 %v293
        %v374 = vpop.f32.mrb[0].mxu0
        %v375 = vadd.f32 0.0, %v374
        %v376 = vpop.f32.mrb[0].mxu0
        %v377 = vadd.f32 0.0, %v376
        %378 = vdwg.mxu0
        %379 = vmatprep.subr.mxu0 %v274
        %380 = vmatpush1.msra.mxu0 %v273
        %381 = vmatprep.subr.mxu0 %v278
        %382 = vmatpush1.msra.mxu0 %v277
        %383 = vmatprep.subr.mxu0 %v282
        %384 = vmatpush1.msra.mxu0 %v281
        %385 = vmatprep.subr.mxu0 %v286
        %386 = vmatpush1.msra.mxu0 %v285
        %387 = vmatprep.subr.mxu0 %v306
        %388 = vmatpush1.msra.mxu0 %v303
        %389 = vmatprep.subr.mxu0 0.0
        %390 = vmatpush1.msra.mxu0 0.0
        %391 = vmatprep.subr.mxu0 0.0
        %392 = vmatpush1.msra.mxu0 0.0
        %393 = vmatprep.subr.mxu0 0.0
        %394 = vmatpush1.msra.mxu0 0.0
        %395 = vmatprep.subr.mxu0 0.0
        %396 = vmatpush1.msra.mxu0 0.0
        %397 = vmatprep.subr.mxu0 0.0
        %398 = vmatpush1.msra.mxu0 0.0
        %399 = vmatprep.subr.mxu0 0.0
        %400 = vmatpush1.msra.mxu0 0.0
        %401 = vmatprep.subr.mxu0 0.0
        %402 = vmatpush1.msra.mxu0 0.0
        %403 = vmatprep.subr.mxu0 0.0
        %404 = vmatpush1.msra.mxu0 0.0
        %405 = vmatprep.subr.mxu0 0.0
        %406 = vmatpush1.msra.mxu0 0.0
        %407 = vmatprep.subr.mxu0 0.0
        %408 = vmatpush1.msra.mxu0 0.0
        %409 = vmatprep.subr.mxu0 0.0
        %410 = vmatpush1.msra.mxu0 0.0
        %411 = vmatprep.subr.mxu0 0.0
        %412 = vmatpush1.msra.mxu0 0.0
        %413 = vmatprep.subr.mxu0 0.0
        %414 = vmatpush1.msra.mxu0 0.0
        %415 = vmatprep.subr.mxu0 0.0
        %416 = vmatpush1.msra.mxu0 0.0
        %417 = vmatprep.subr.mxu0 0.0
        %418 = vmatpush1.msra.mxu0 0.0
        %419 = vmatprep.subr.mxu0 0.0
        %420 = vmatpush1.msra.mxu0 0.0
        %421 = vmatprep.subr.mxu0 0.0
        %422 = vmatpush1.msra.mxu0 0.0
        %423 = vmatprep.subr.mxu0 0.0
        %424 = vmatpush1.msra.mxu0 0.0
        %425 = vmatprep.subr.mxu0 0.0
        %426 = vmatpush1.msra.mxu0 0.0
        %427 = vmatprep.subr.mxu0 0.0
        %428 = vmatpush1.msra.mxu0 0.0
        %429 = vmatprep.subr.mxu0 0.0
        %430 = vmatpush1.msra.mxu0 0.0
        %431 = vmatprep.subr.mxu0 0.0
        %432 = vmatpush1.msra.mxu0 0.0
        %433 = vmatprep.subr.mxu0 0.0
        %434 = vmatpush1.msra.mxu0 0.0
        %435 = vmatprep.subr.mxu0 0.0
        %436 = vmatpush1.msra.mxu0 0.0
        %437 = vmatprep.subr.mxu0 0.0
        %438 = vmatpush1.msra.mxu0 0.0
        %439 = vmatprep.subr.mxu0 0.0
        %440 = vmatpush1.msra.mxu0 0.0
        %441 = vmatprep.subr.mxu0 0.0
        %442 = vmatpush1.msra.mxu0 0.0
        %443 = vmatprep.mubr.f32.mxu0 0.0
        %444 = vmatmul.mubr.f32.gmra.mrb[0].mxu0 %v293
        %v445 = vpop.f32.mrb[0].mxu0
        %v446 = vadd.f32 0.0, %v445
        %v447 = vpop.f32.mrb[0].mxu0
        %v448 = vadd.f32 0.0, %v447
        %449 = vdwg.mxu0
        %v450 = vmax.f32 %v375, %v377
        %451 = vmax.xlane.f32.xlu0 %v450
        %v452 = vpop.xlane.xlu0 %451
        %v453 = vsub.f32 %v375, %v452
        %v454 = vsub.f32 %v377, %v452
        %v455 = vmul.f32 %v453, 1.442695
        %v456 = vpow.pop %v455
        %v457 = vmul.f32 %v454, 1.442695
        %v458 = vpow.pop %v457
        %v459 = vadd.f32 %v456, %v458
        %460 = vadd.xlane.f32.xlu0 %v459
        %v461 = vpop.xlane.xlu0 %460
        %v462 = vrcp.pop %v461
        %v463 = vmul.f32 %v456, %v462
        %v464 = vmul.f32 %v458, %v462
        %v465 = vld [vmem:[%s269] sm:$0xff]
        %v466 = vmul.f32 %v465, 1.442695
        %v467 = vpow.pop %v466
        %v468 = vmul.f32 %v467, %v462
        %470 = vset.pattern.permute.xlu0 0
        %471 = vperm.xlu0 %470, %v468
        %v472 = vpop.permute.xlu0 %471
        %v474 = vmul.f32 %v456, %v472
        %v475 = vmul.f32 %v458, %v472
        %476 = vst [vmem:[%s247] sm:$0xff] %v463
        %vm477 = vcmask 588800
        %478 = vst.msk [vmem:[%s247 + $0x8] sm:$0xff] %vm477, %v464
        %479 = vst [vmem:[%s254] sm:$0xff] %v474
        %480 = vst.msk [vmem:[%s254 + $0x8] sm:$0xff] %vm477, %v475
        %481 = vst [vmem:[%s261] sm:$0xff] %v446
        %482 = vst.msk [vmem:[%s261 + $0x8] sm:$0xff] %vm477, %v448
        %s483 = sand.u32 %s105, 1
        %s484 = scalar_lea.sflag [#allocation4], %s483
        %s485 = sand.u32 %s105, 1
        %s486 = smul.addr %s485, 16
        %s487 = scalar_lea.vmem [#allocation5], %s486
        %s488 = sand.u32 %s24, 1
        %s489 = scalar_lea.sflag [#allocation7], %s488
        %s490 = sand.u32 %s131, 1
        %s491 = smul.addr %s490, 16
        %s492 = scalar_lea.vmem [#allocation6], %s491
        %s493 = sand.u32 %s24, 1
        %s494 = scalar_lea.sflag [#allocation7], %s493
        %s495 = sand.u32 %s157, 1
        %s496 = smul.addr %s495, 16
        %s497 = scalar_lea.vmem [#allocation8], %s496
        // Predicated region
        $region37: #{linear_decoder_scvi.1} parent=31 // pred_check
          %p498 = pneg %p115
        $region38: #{linear_decoder_scvi.1} parent=31 // pred_check_branch
          %500 = sbr.rel (%p498) target = $region40
        $region39: #{linear_decoder_scvi.1} parent=31 // pred_region
          %s502 = ssub.s32 256, 256
          %503 = vsyncadd %s484, %s502
          %s504 = smul.addr %s24, 2
          %s505 = smul.addr %s504, 128
          %s506 = scalar_lea.hbm %s3, %s505
          %s508 = sshll.u32 %s487, 4
          %s509 = int_to_ptr.vmem [resolvable:$true] %s508
          %511 = dma.vmem_to_hbm [thread:$0]  %s509, 256, %s506, %s484
        $region40: #{linear_decoder_scvi.1} parent=31 // pred_fallthru
          _
        // Predicated region
        $region41: #{linear_decoder_scvi.1} parent=31 // pred_check
          %p512 = pneg %p141
        $region42: #{linear_decoder_scvi.1} parent=31 // pred_check_branch
          %514 = sbr.rel (%p512) target = $region44
        $region43: #{linear_decoder_scvi.1} parent=31 // pred_region
          %s516 = ssub.s32 256, 256
          %517 = vsyncadd %s489, %s516
          %s518 = smul.addr %s24, 2
          %s519 = smul.addr %s518, 128
          %s520 = scalar_lea.hbm %s4, %s519
          %s522 = sshll.u32 %s492, 4
          %s523 = int_to_ptr.vmem [resolvable:$true] %s522
          %525 = dma.vmem_to_hbm [thread:$0]  %s523, 256, %s520, %s489
        $region44: #{linear_decoder_scvi.1} parent=31 // pred_fallthru
          _
        // Predicated region
        $region45: #{linear_decoder_scvi.1} parent=31 // pred_check
          %p526 = pneg %p167
        $region46: #{linear_decoder_scvi.1} parent=31 // pred_check_branch
          %528 = sbr.rel (%p526) target = $region48
        $region47: #{linear_decoder_scvi.1} parent=31 // pred_region
          %s530 = ssub.s32 256, 256
          %531 = vsyncadd %s494, %s530
          %s532 = smul.addr %s24, 2
          %s533 = smul.addr %s532, 128
          %s534 = scalar_lea.hbm %s5, %s533
          %s536 = sshll.u32 %s497, 4
          %s537 = int_to_ptr.vmem [resolvable:$true] %s536
          %539 = dma.vmem_to_hbm [thread:$0]  %s537, 256, %s534, %s494
        $region48: #{linear_decoder_scvi.1} parent=31 // pred_fallthru
          _
      $region32: #{linear_decoder_scvi.1} parent=5 // pred_fallthru
        _
      %p540 = scmp.le.s32.totalorder 2, %s19
      // Predicated region
      $region49: #{linear_decoder_scvi.1} parent=5 // pred_check
        %p541 = pneg %p540
      $region50: #{linear_decoder_scvi.1} parent=5 // pred_check_branch
        %543 = sbr.rel (%p541) target = $region52
      $region51: #{linear_decoder_scvi.1} parent=5 // pred_region
        %s544 = ssub.s32 %s19, 2
        // Predicated region
        $region53: #{linear_decoder_scvi.1} parent=51 // pred_check
          %p545 = pneg %p121
        $region54: #{linear_decoder_scvi.1} parent=51 // pred_check_branch
          %547 = sbr.rel (%p545) target = $region56
        $region55: #{linear_decoder_scvi.1} parent=51 // pred_region
          %s548 = sand.u32 %s106, 1
          %s549 = scalar_lea.sflag [#allocation4], %s548
          %s550 = sand.u32 %s106, 1
          %s551 = smul.addr %s550, 16
          %s552 = scalar_lea.vmem [#allocation5], %s551
          %553 = dma.done %s549, 256
        $region56: #{linear_decoder_scvi.1} parent=51 // pred_fallthru
          _
        // Predicated region
        $region57: #{linear_decoder_scvi.1} parent=51 // pred_check
          %p554 = pneg %p147
        $region58: #{linear_decoder_scvi.1} parent=51 // pred_check_branch
          %556 = sbr.rel (%p554) target = $region60
        $region59: #{linear_decoder_scvi.1} parent=51 // pred_region
          %s557 = sand.u32 %s25, 1
          %s558 = scalar_lea.sflag [#allocation7], %s557
          %s559 = sand.u32 %s132, 1
          %s560 = smul.addr %s559, 16
          %s561 = scalar_lea.vmem [#allocation6], %s560
          %562 = dma.done %s558, 256
        $region60: #{linear_decoder_scvi.1} parent=51 // pred_fallthru
          _
        // Predicated region
        $region61: #{linear_decoder_scvi.1} parent=51 // pred_check
          %p563 = pneg %p173
        $region62: #{linear_decoder_scvi.1} parent=51 // pred_check_branch
          %565 = sbr.rel (%p563) target = $region64
        $region63: #{linear_decoder_scvi.1} parent=51 // pred_region
          %s566 = sand.u32 %s25, 1
          %s567 = scalar_lea.sflag [#allocation7], %s566
          %s568 = sand.u32 %s158, 1
          %s569 = smul.addr %s568, 16
          %s570 = scalar_lea.vmem [#allocation8], %s569
          %571 = dma.done %s567, 256
        $region64: #{linear_decoder_scvi.1} parent=51 // pred_fallthru
          _
      $region52: #{linear_decoder_scvi.1} parent=5 // pred_fallthru
        _
    $region6: #{linear_decoder_scvi.1} parent=1 // loop_footer
      %s23 = sadd.s32 1, %s19
    $region7: #{linear_decoder_scvi.1} parent=1 // loop_footer_branch
      %18 = sbr.rel target = $region3
    $region8: #{linear_decoder_scvi.1} parent=1 // loop_exit
      _
    %572 = vsyncpa [#allocation3], 1
    %s573 = scalar_lea.sflag [#allocation3], 1
    %574 = vsyncpa %s573, 1
    %575 = vsyncpa [#allocation4], 1
    %s576 = scalar_lea.sflag [#allocation4], 1
    %577 = vsyncpa %s576, 1
    %578 = vsyncpa [#allocation7], 1
    %s579 = scalar_lea.sflag [#allocation7], 1
    %580 = vsyncpa %s579, 1

</llo_original>
